<compile_context>
chip_gen: v5e
topology: v5e:2x2
jax: 0.10.0
libtpu: 0.0.40
codegen_flags: <defaults>
</compile_context>

<pallas_src>
import jax
import jax.numpy as jnp
from jax.experimental import pallas as pl
from jax.experimental.pallas import tpu as pltpu


def _cdiv(a, b):
    return -(-a // b)


def _round_up(a, b):
    return _cdiv(a, b) * b


def _make_kernel(num_hidden, matmul_dtype):
    """Kernel for an MLP with `num_hidden` hidden layers + 1 output layer.

    Inputs per grid step (block shape (1, 1, N), N = positions on lanes):
      y_prev, yp_prev : already-shifted features.
    Params (full arrays, resident):
      w0_y (H0,1) f32, w0_p (H0,1) f32, b0 (H0,1) f32,
      [W_i (H_i, H_{i-1}) matmul_dtype, b_i (H_i,1) f32] for i = 1..num_hidden-1,
      w_out (H_last,1) f32, b_out (1,1) f32.
    """

    def kernel(*refs):
        ypr_ref, yppr_ref = refs[0], refs[1]
        o_ref = refs[-1]
        p = refs[2:-1]

        y_prev = ypr_ref[0]        # (1, N)
        yp_prev = yppr_ref[0]      # (1, N)

        # ---- Layer 0: Linear(2 -> H0) + ReLU as VPU broadcast FMAs ----------
        # (a K=2 MXU matmul wastes 126/128 of the contraction dim; the feature
        #  concat disappears entirely.)
        w0_y, w0_p, b0 = p[0][...], p[1][...], p[2][...]          # (H0, 1) each
        h = jnp.maximum(w0_y * y_prev + w0_p * yp_prev + b0, 0.0)  # (H0, N) f32

        # ---- Hidden layers: square matmuls on the MXU, wide N = positions ---
        # W refs already hold matmul_dtype (pre-cast in the wrapper); only the
        # activations are cast per layer.  Accumulation stays f32.
        for i in range(num_hidden - 1):
            w = p[3 + 2 * i][...]                                  # (H_i, H_{i-1})
            b = p[4 + 2 * i][...]                                  # (H_i, 1) f32
            h = jnp.dot(w, h.astype(matmul_dtype),
                        preferred_element_type=jnp.float32) + b
            h = jnp.maximum(h, 0.0)
            # Dropout(p=0.0) == identity (inference semantics).

        # ---- Output layer: Linear(H_last -> 1) as VPU mul + XLU sublane sum -
        # (an M=1 matmul would occupy a full MXU push for one result row.)
        w_out, b_out = p[-2][...], p[-1][...]                      # (H,1), (1,1)
        out = jnp.sum(w_out * h, axis=0, keepdims=True) + b_out    # (1, N)
        o_ref[...] = out.reshape(o_ref.shape).astype(o_ref.dtype)

    return kernel


def neural_ar_forward(y, y_pred, params, matmul_dtype=jnp.bfloat16):
    """params: list of (W, b) with W (out, in), b (out,) -- PyTorch Linear layout."""
    B, T = y.shape
    num_hidden = len(params) - 1
    assert num_hidden >= 1

    f32 = jnp.float32
    y = y.astype(f32)
    y_pred = y_pred.astype(f32)

    # Autoregressive shift precomputed here (see header comment).
    zeros = jnp.zeros((B, 1), f32)
    y_prev = jnp.concatenate([zeros, y[:, :-1]], axis=1)
    yp_prev = jnp.concatenate([zeros, y_pred[:, :-1]], axis=1)

    # ---- Choose a position-block size --------------------------------------
    total = B * T
    POS_BLOCK_MAX = 32 * 1024          # (32, 32K) f32 temp = 4 MiB; fits under the
                                       # explicit 48 MiB VMEM limit on all gens.
    if total <= 2 * POS_BLOCK_MAX:
        # Small/medium: aim for exactly 2 lane-aligned blocks (one per v7x TC),
        # falling back to 1 block when everything fits in a single 128-lane tile.
        pos_block = max(128, _round_up(_cdiv(total, 2), 128))
        nblk = _cdiv(total, pos_block)
    else:
        # Large: cap the block size, then keep the block count EVEN and re-split
        # so the ("parallel",) grid axis load-balances across v7x's two
        # TensorCores with minimal padding (harmless on single-TC v5e/v6e).
        nblk = _cdiv(total, POS_BLOCK_MAX)
        if nblk % 2:
            nblk += 1
        pos_block = _round_up(_cdiv(total, nblk), 128)
    padded = nblk * pos_block

    def to_blocks(a):
        flat = a.reshape(-1)
        if padded != total:
            flat = jnp.pad(flat, (0, padded - total))
        return flat.reshape(nblk, 1, pos_block)

    yb = to_blocks(y_prev)
    ypb = to_blocks(yp_prev)

    # ---- Pack params into kernel-friendly shapes (no in-kernel reshapes) ----
    # Layer-0 / output / bias params stay f32 (they run on the VPU / are added
    # post-accumulation); hidden W matrices are pre-cast to matmul_dtype once.
    flat_params = []
    w0, b0 = params[0]
    flat_params += [w0[:, 0:1].astype(f32),          # column for y       (H0, 1)
                    w0[:, 1:2].astype(f32),          # column for y_pred  (H0, 1)
                    b0.astype(f32).reshape(-1, 1)]   # (H0, 1)
    for (w, b) in params[1:-1]:
        flat_params += [w.astype(matmul_dtype),      # (H_i, H_{i-1}) matmul_dtype
                        b.astype(f32).reshape(-1, 1)]
    wo, bo = params[-1]
    flat_params += [wo.astype(f32).reshape(-1, 1),   # (H_last, 1)
                    bo.astype(f32).reshape(1, 1)]    # (1, 1)

    seq_spec = pl.BlockSpec((1, 1, pos_block), lambda i: (i, 0, 0))
    param_specs = [pl.BlockSpec(p.shape, lambda i: (0, 0)) for p in flat_params]

    out3 = pl.pallas_call(
        _make_kernel(num_hidden, matmul_dtype),
        out_shape=jax.ShapeDtypeStruct((nblk, 1, pos_block), f32),
        grid_spec=pltpu.PrefetchScalarGridSpec(
            num_scalar_prefetch=0,
            grid=(nblk,),
            in_specs=[seq_spec, seq_spec] + param_specs,
            out_specs=seq_spec,
        ),
        compiler_params=pltpu.CompilerParams(
            dimension_semantics=("parallel",),
            # Above the v5e (16 MiB) / v6e (32 MiB) scoped defaults, below
            # v7x's 64 MiB physical VMEM.
            vmem_limit_bytes=48 * 1024 * 1024,
        ),
    )(yb, ypb, *flat_params)

    # Padded tail positions compute garbage that is discarded right here; out3
    # is never exposed untrimmed.
    return out3.reshape(-1)[:total].reshape(B, T)


def neural_ar_reference(y, y_pred, params):
    """Pure-JAX reference matching the intended PyTorch forward semantics."""
    x = jnp.stack([y, y_pred], axis=2)                               # (B, T, 2)
    x = jnp.concatenate([jnp.zeros_like(x[:, :1, :]), x[:, :-1, :]], axis=1)
    h = x
    for w, b in params[:-1]:
        h = jax.nn.relu(h @ w.T + b)
    w, b = params[-1]
    return (h @ w.T + b)[..., 0]                                     # (B, T)


def init_params(key, hidden_sizes):
    """Deterministic PyTorch-Linear-style init: U(-1/sqrt(fan_in), 1/sqrt(fan_in))."""
    sizes = [2] + list(hidden_sizes) + [1]
    params = []
    for i in range(len(sizes) - 1):
        fan_in, fan_out = sizes[i], sizes[i + 1]
        key, kw, kb = jax.random.split(key, 3)
        bound = 1.0 / float(jnp.sqrt(float(fan_in)))
        w = jax.random.uniform(kw, (fan_out, fan_in), jnp.float32, -bound, bound)
        b = jax.random.uniform(kb, (fan_out,), jnp.float32, -bound, bound)
        params.append((w, b))
    return params


if __name__ == "__main__":
    key = jax.random.PRNGKey(0)
    k1, k2, kp = jax.random.split(key, 3)

    B, T = 4, 256                      # small demo shapes; 1024 positions
    hidden_sizes = (32, 32)            # -> 2 grid steps of 512 positions each

    y = jax.random.normal(k1, (B, T), jnp.float32)
    y_pred = jax.random.normal(k2, (B, T), jnp.float32)
    params = init_params(kp, hidden_sizes)

    ref = neural_ar_reference(y, y_pred, params)

    # Default path: bf16 MXU matmuls with f32 accumulation (the perf target).
    out_bf16 = jax.block_until_ready(neural_ar_forward(y, y_pred, params))
    assert out_bf16.shape == (B, T), out_bf16.shape
    err_bf16 = float(jnp.max(jnp.abs(out_bf16 - ref)))
    assert jnp.allclose(out_bf16, ref, atol=2e-2, rtol=2e-2), f"bf16 max_err={err_bf16}"

    # f32 path: tight check that the kernel structure itself is exact.
    out_f32 = jax.block_until_ready(
        neural_ar_forward(y, y_pred, params, matmul_dtype=jnp.float32))
    err_f32 = float(jnp.max(jnp.abs(out_f32 - ref)))
    assert jnp.allclose(out_f32, ref, atol=2e-5, rtol=2e-5), f"f32 max_err={err_f32}"

    print("KERNEL_OK")
</pallas_src>

<mosaic_0001>
module attributes {stable_mosaic.version = 11 : i64} {
  func.func @kernel(%arg0: i32, %arg1: memref<1x1x512xf32, #tpu.memory_space<vmem>>, %arg2: memref<1x1x512xf32, #tpu.memory_space<vmem>>, %arg3: memref<32x1xf32, #tpu.memory_space<vmem>>, %arg4: memref<32x1xf32, #tpu.memory_space<vmem>>, %arg5: memref<32x1xf32, #tpu.memory_space<vmem>>, %arg6: memref<32x32xbf16, #tpu.memory_space<vmem>>, %arg7: memref<32x1xf32, #tpu.memory_space<vmem>>, %arg8: memref<32x1xf32, #tpu.memory_space<vmem>>, %arg9: memref<1x1xf32, #tpu.memory_space<vmem>>, %arg10: memref<1x1x512xf32, #tpu.memory_space<vmem>>) attributes {dimension_semantics = [#tpu.dimension_semantics<parallel>], iteration_bounds = array<i64: 2>, scalar_prefetch = 0 : i64, scratch_operands = 0 : i64, tpu.core_type = #tpu.core_type<tc>, window_params = [{transform_indices = @transform_0, window_bounds = array<i64: 1, 1, 512>}, {transform_indices = @transform_1, window_bounds = array<i64: 1, 1, 512>}, {pipeline_mode = #tpu.pipeline_mode<synchronous>, transform_indices = @transform_2, window_bounds = array<i64: 32, 1>}, {pipeline_mode = #tpu.pipeline_mode<synchronous>, transform_indices = @transform_3, window_bounds = array<i64: 32, 1>}, {pipeline_mode = #tpu.pipeline_mode<synchronous>, transform_indices = @transform_4, window_bounds = array<i64: 32, 1>}, {pipeline_mode = #tpu.pipeline_mode<synchronous>, transform_indices = @transform_5, window_bounds = array<i64: 32, 32>}, {pipeline_mode = #tpu.pipeline_mode<synchronous>, transform_indices = @transform_6, window_bounds = array<i64: 32, 1>}, {pipeline_mode = #tpu.pipeline_mode<synchronous>, transform_indices = @transform_7, window_bounds = array<i64: 32, 1>}, {pipeline_mode = #tpu.pipeline_mode<synchronous>, transform_indices = @transform_8, window_bounds = array<i64: 1, 1>}, {transform_indices = @transform_9, window_bounds = array<i64: 1, 1, 512>}]} {
    %c0 = arith.constant 0 : index
    %c0_0 = arith.constant 0 : index
    %c0_1 = arith.constant 0 : index
    %0 = vector.load %arg1[%c0, %c0_0, %c0_1] : memref<1x1x512xf32, #tpu.memory_space<vmem>>, vector<1x1x512xf32>
    %1 = vector.shape_cast %0 : vector<1x1x512xf32> to vector<1x512xf32>
    %c0_2 = arith.constant 0 : index
    %c0_3 = arith.constant 0 : index
    %c0_4 = arith.constant 0 : index
    %2 = vector.load %arg2[%c0_2, %c0_3, %c0_4] : memref<1x1x512xf32, #tpu.memory_space<vmem>>, vector<1x1x512xf32>
    %3 = vector.shape_cast %2 : vector<1x1x512xf32> to vector<1x512xf32>
    %c0_5 = arith.constant 0 : index
    %c0_6 = arith.constant 0 : index
    %4 = vector.load %arg3[%c0_5, %c0_6] : memref<32x1xf32, #tpu.memory_space<vmem>>, vector<32x1xf32>
    %c0_7 = arith.constant 0 : index
    %c0_8 = arith.constant 0 : index
    %5 = vector.load %arg4[%c0_7, %c0_8] : memref<32x1xf32, #tpu.memory_space<vmem>>, vector<32x1xf32>
    %c0_9 = arith.constant 0 : index
    %c0_10 = arith.constant 0 : index
    %6 = vector.load %arg5[%c0_9, %c0_10] : memref<32x1xf32, #tpu.memory_space<vmem>>, vector<32x1xf32>
    %7 = vector.broadcast %4 : vector<32x1xf32> to vector<32x512xf32>
    %8 = vector.broadcast %1 : vector<1x512xf32> to vector<32x512xf32>
    %9 = arith.mulf %7, %8 : vector<32x512xf32>
    %10 = vector.broadcast %5 : vector<32x1xf32> to vector<32x512xf32>
    %11 = vector.broadcast %3 : vector<1x512xf32> to vector<32x512xf32>
    %12 = arith.mulf %10, %11 : vector<32x512xf32>
    %13 = arith.addf %9, %12 : vector<32x512xf32>
    %14 = vector.broadcast %6 : vector<32x1xf32> to vector<32x512xf32>
    %15 = arith.addf %13, %14 : vector<32x512xf32>
    %cst = arith.constant 0.000000e+00 : f32
    %16 = vector.broadcast %cst : f32 to vector<32x512xf32>
    %17 = arith.maximumf %15, %16 : vector<32x512xf32>
    %c0_11 = arith.constant 0 : index
    %c0_12 = arith.constant 0 : index
    %18 = vector.load %arg6[%c0_11, %c0_12] : memref<32x32xbf16, #tpu.memory_space<vmem>>, vector<32x32xbf16>
    %c0_13 = arith.constant 0 : index
    %c0_14 = arith.constant 0 : index
    %19 = vector.load %arg7[%c0_13, %c0_14] : memref<32x1xf32, #tpu.memory_space<vmem>>, vector<32x1xf32>
    %20 = arith.truncf %17 : vector<32x512xf32> to vector<32x512xbf16>
    %cst_15 = arith.constant dense<0.000000e+00> : vector<32x512xf32>
    %21 = tpu.matmul %18, %20, %cst_15 {dimension_numbers = #tpu.dot_dimension_numbers<[1], [0], [0], [1], [0, 0, 1, 1], [], []>} : vector<32x32xbf16>, vector<32x512xbf16>, vector<32x512xf32> -> vector<32x512xf32>
    %22 = vector.broadcast %19 : vector<32x1xf32> to vector<32x512xf32>
    %23 = arith.addf %21, %22 : vector<32x512xf32>
    %cst_16 = arith.constant 0.000000e+00 : f32
    %24 = vector.broadcast %cst_16 : f32 to vector<32x512xf32>
    %25 = arith.maximumf %23, %24 : vector<32x512xf32>
    %c0_17 = arith.constant 0 : index
    %c0_18 = arith.constant 0 : index
    %26 = vector.load %arg8[%c0_17, %c0_18] : memref<32x1xf32, #tpu.memory_space<vmem>>, vector<32x1xf32>
    %c0_19 = arith.constant 0 : index
    %c0_20 = arith.constant 0 : index
    %27 = vector.load %arg9[%c0_19, %c0_20] : memref<1x1xf32, #tpu.memory_space<vmem>>, vector<1x1xf32>
    %28 = vector.broadcast %26 : vector<32x1xf32> to vector<32x512xf32>
    %29 = arith.mulf %28, %25 : vector<32x512xf32>
    %cst_21 = arith.constant dense<0.000000e+00> : vector<512xf32>
    %30 = vector.multi_reduction <add>, %29, %cst_21 [0] : vector<32x512xf32> to vector<512xf32>
    %31 = vector.shape_cast %30 : vector<512xf32> to vector<1x512xf32>
    %32 = vector.broadcast %27 : vector<1x1xf32> to vector<1x512xf32>
    %33 = arith.addf %31, %32 : vector<1x512xf32>
    %34 = vector.shape_cast %33 : vector<1x512xf32> to vector<1x1x512xf32>
    %c0_22 = arith.constant 0 : index
    %c0_23 = arith.constant 0 : index
    %c0_24 = arith.constant 0 : index
    %35 = vector.load %arg10[%c0_22, %c0_23, %c0_24] : memref<1x1x512xf32, #tpu.memory_space<vmem>>, vector<1x1x512xf32>
    tpu.vector_store %arg10[%c0_22, %c0_23, %c0_24], %34 {strides = array<i32>} : memref<1x1x512xf32, #tpu.memory_space<vmem>>, vector<1x1x512xf32>,
    return
  }
  func.func @transform_0(%arg0: i32) -> (i32, i32, i32) {
    %c0_i32 = arith.constant 0 : i32
    %c0_i32_0 = arith.constant 0 : i32
    %c0_i32_1 = arith.constant 0 : i32
    return %arg0, %c0_i32, %c0_i32_0 : i32, i32, i32
  }
  func.func @transform_1(%arg0: i32) -> (i32, i32, i32) {
    %c0_i32 = arith.constant 0 : i32
    %c0_i32_0 = arith.constant 0 : i32
    %c0_i32_1 = arith.constant 0 : i32
    return %arg0, %c0_i32, %c0_i32_0 : i32, i32, i32
  }
  func.func @transform_2(%arg0: i32) -> (i32, i32) {
    %c0_i32 = arith.constant 0 : i32
    %c0_i32_0 = arith.constant 0 : i32
    %c0_i32_1 = arith.constant 0 : i32
    return %c0_i32, %c0_i32_0 : i32, i32
  }
  func.func @transform_3(%arg0: i32) -> (i32, i32) {
    %c0_i32 = arith.constant 0 : i32
    %c0_i32_0 = arith.constant 0 : i32
    %c0_i32_1 = arith.constant 0 : i32
    return %c0_i32, %c0_i32_0 : i32, i32
  }
  func.func @transform_4(%arg0: i32) -> (i32, i32) {
    %c0_i32 = arith.constant 0 : i32
    %c0_i32_0 = arith.constant 0 : i32
    %c0_i32_1 = arith.constant 0 : i32
    return %c0_i32, %c0_i32_0 : i32, i32
  }
  func.func @transform_5(%arg0: i32) -> (i32, i32) {
    %c0_i32 = arith.constant 0 : i32
    %c0_i32_0 = arith.constant 0 : i32
    %c0_i32_1 = arith.constant 0 : i32
    return %c0_i32, %c0_i32_0 : i32, i32
  }
  func.func @transform_6(%arg0: i32) -> (i32, i32) {
    %c0_i32 = arith.constant 0 : i32
    %c0_i32_0 = arith.constant 0 : i32
    %c0_i32_1 = arith.constant 0 : i32
    return %c0_i32, %c0_i32_0 : i32, i32
  }
  func.func @transform_7(%arg0: i32) -> (i32, i32) {
    %c0_i32 = arith.constant 0 : i32
    %c0_i32_0 = arith.constant 0 : i32
    %c0_i32_1 = arith.constant 0 : i32
    return %c0_i32, %c0_i32_0 : i32, i32
  }
  func.func @transform_8(%arg0: i32) -> (i32, i32) {
    %c0_i32 = arith.constant 0 : i32
    %c0_i32_0 = arith.constant 0 : i32
    %c0_i32_1 = arith.constant 0 : i32
    return %c0_i32, %c0_i32_0 : i32, i32
  }
  func.func @transform_9(%arg0: i32) -> (i32, i32, i32) {
    %c0_i32 = arith.constant 0 : i32
    %c0_i32_0 = arith.constant 0 : i32
    %c0_i32_1 = arith.constant 0 : i32
    return %arg0, %c0_i32, %c0_i32_0 : i32, i32, i32
  }
}

</mosaic_0001>

<llo_original>
// kernel: tpu_custom_call.1
$region0: #{tpu_custom_call.1}
  #allocation0 [shape = 'u32[]', space=smem, size = 0x4, offset = 0x4, fixed_abs, tag = 'smem constant byte address 0x4 - core index']
  #allocation1 [shape = 'u32[72,128]{1,0:T(1,128)}', space=vmem, size = 0x9000, scoped, tag = 'internal scratch']
  #allocation2 [shape = 'f32[1,1]{1,0:T(1,128)S(1)}', space=vmem, size = 0x200, scoped, tag = 'scoped memory for tpu_custom_call.1']
  %s0 = inlined_call_operand.vmem [shape: f32[2,1,512], index: 0, kind: input, shape index: {}]
  %s1 = inlined_call_operand.vmem [shape: f32[2,1,512], index: 1, kind: input, shape index: {}]
  %s2 = inlined_call_operand.vmem [shape: f32[32,1], index: 2, kind: input, shape index: {}]
  %s3 = inlined_call_operand.vmem [shape: f32[32,1], index: 3, kind: input, shape index: {}]
  %s4 = inlined_call_operand.vmem [shape: f32[32,1], index: 4, kind: input, shape index: {}]
  %s5 = inlined_call_operand.vmem [shape: bf16[32,32], index: 5, kind: input, shape index: {}]
  %s6 = inlined_call_operand.vmem [shape: f32[32,1], index: 6, kind: input, shape index: {}]
  %s7 = inlined_call_operand.vmem [shape: f32[32,1], index: 7, kind: input, shape index: {}]
  %s8 = inlined_call_operand.<no memory space> [shape: f32[1,1], index: 8, kind: input, shape index: {}]
  %s9 = inlined_call_operand.hbm [shape: f32[2,1,512], index: 9, kind: output, shape index: {}]
  %s10 = sld [smem:[#allocation0]]
  $region69: #{tpu_custom_call.1} parent=0
    _
  %s12 = ssub.s32 1, %s10
  %s13 = scalar_select 0, %s12, %s10
  %v14 = vstv %s8
  %15 = vst [vmem:[#allocation2] sm:$0x1] %v14
  $region1: #{tpu_custom_call.1} parent=0
    #allocation3 [shape = 'u8[4096]{0}', space=vmem, size = 0x1000, scoped, tag = 'output window, operand 0']
    #allocation4 [shape = 's32[2]{0}', space=sflag, size = 0x8, scoped, tag = 'scoped memory for tpu_custom_call.1']
    %16 = vsyncpa [#allocation4], 0
    %s17 = scalar_lea.sflag [#allocation4], 1
    %18 = vsyncpa %s17, 0
    loop: start=0, step=1, limit=4
    $region2: #{tpu_custom_call.1} parent=1 // loop_pre_header
      _
    $region3: #{tpu_custom_call.1} parent=1 // loop_header
      %s20 = sphi 0, %s24
      %p21 = scmp.ge.s32.totalorder %s20, 4
      %s30 = sphi 0, %s32
      %s33 = sphi 0, %s30
      %s34 = sphi 0, %s33
      %s50 = sphi 0, %s34
      %s56 = sphi 0, %s58
      %s59 = sphi 0, %s56
      %s60 = sphi 0, %s59
      %s76 = sphi 0, %s60
      %s80 = sphi 0, %s80
      %s82 = sphi 0, %s80
      %s83 = sphi 0, %s82
      %s97 = sphi 0, %s83
      %s101 = sphi 0, %s101
      %s103 = sphi 0, %s101
      %s104 = sphi 0, %s103
      %s118 = sphi 0, %s104
      %s122 = sphi 0, %s122
      %s124 = sphi 0, %s122
      %s125 = sphi 0, %s124
      %s139 = sphi 0, %s125
      %s143 = sphi 0, %s143
      %s145 = sphi 0, %s143
      %s146 = sphi 0, %s145
      %s160 = sphi 0, %s146
      %s164 = sphi 0, %s164
      %s166 = sphi 0, %s164
      %s167 = sphi 0, %s166
      %s181 = sphi 0, %s167
      %s185 = sphi 0, %s185
      %s187 = sphi 0, %s185
      %s188 = sphi 0, %s187
      %s202 = sphi 0, %s188
      %s206 = sphi 0, %s206
      %s208 = sphi 0, %s206
      %s209 = sphi 0, %s208
      %s223 = sphi 0, %s209
      %s229 = sphi 0, %s231
      %s232 = sphi 0, %s229
      %s233 = sphi 0, %s232
      %s249 = sphi 0, %s233
    $region4: #{tpu_custom_call.1} parent=1 // loop_header_branch
      %23 = sbr.rel (%p21) target = $region8
    $region5: #{tpu_custom_call.1} parent=1 // loop_body
      %s25 = ssub.s32 %s20, 1
      %s26 = ssub.s32 %s20, 2
      %s27 = sadd.s32 %s20, 1
      %s28 = ssub.s32 %s20, %s27
      %p29 = scmp.eq.s32.totalorder %s28, 0
      %s31 = sadd.s32 %s30, 1
      %s32 = scalar_select %p29, %s30, %s31
      %p35 = pneg %p29
      %p36 = scmp.eq.s32.totalorder %s20, 1
      %p37 = por %p35, %p36
      %p38 = scmp.ne.s32.totalorder %s30, %s33
      %p39 = scmp.eq.s32.totalorder %s20, 0
      %p40 = por %p38, %p39
      %p41 = scmp.ne.s32.totalorder %s30, %s33
      %p42 = scmp.eq.s32.totalorder %s25, 1
      %p43 = por %p41, %p42
      %p44 = scmp.ne.s32.totalorder %s33, %s34
      %p45 = scmp.eq.s32.totalorder %s25, 0
      %p46 = por %p44, %p45
      %p47 = scmp.ne.s32.totalorder %s33, %s34
      %p48 = scmp.eq.s32.totalorder %s26, 1
      %p49 = por %p47, %p48
      %p51 = scmp.ne.s32.totalorder %s34, %s50
      %p52 = scmp.eq.s32.totalorder %s26, 0
      %p53 = por %p51, %p52
      %s54 = ssub.s32 %s20, %s27
      %p55 = scmp.eq.s32.totalorder %s54, 0
      %s57 = sadd.s32 %s56, 1
      %s58 = scalar_select %p55, %s56, %s57
      %p61 = pneg %p55
      %p62 = scmp.eq.s32.totalorder %s20, 1
      %p63 = por %p61, %p62
      %p64 = scmp.ne.s32.totalorder %s56, %s59
      %p65 = scmp.eq.s32.totalorder %s20, 0
      %p66 = por %p64, %p65
      %p67 = scmp.ne.s32.totalorder %s56, %s59
      %p68 = scmp.eq.s32.totalorder %s25, 1
      %p69 = por %p67, %p68
      %p70 = scmp.ne.s32.totalorder %s59, %s60
      %p71 = scmp.eq.s32.totalorder %s25, 0
      %p72 = por %p70, %p71
      %p73 = scmp.ne.s32.totalorder %s59, %s60
      %p74 = scmp.eq.s32.totalorder %s26, 1
      %p75 = por %p73, %p74
      %p77 = scmp.ne.s32.totalorder %s60, %s76
      %p78 = scmp.eq.s32.totalorder %s26, 0
      %p79 = por %p77, %p78
      %s81 = sadd.s32 %s80, 1
      %p84 = scmp.eq.s32.totalorder %s20, 1
      %p85 = scmp.ne.s32.totalorder %s80, %s82
      %p86 = scmp.eq.s32.totalorder %s20, 0
      %p87 = por %p85, %p86
      %p88 = scmp.ne.s32.totalorder %s80, %s82
      %p89 = scmp.eq.s32.totalorder %s25, 1
      %p90 = por %p88, %p89
      %p91 = scmp.ne.s32.totalorder %s82, %s83
      %p92 = scmp.eq.s32.totalorder %s25, 0
      %p93 = por %p91, %p92
      %p94 = scmp.ne.s32.totalorder %s82, %s83
      %p95 = scmp.eq.s32.totalorder %s26, 1
      %p96 = por %p94, %p95
      %p98 = scmp.ne.s32.totalorder %s83, %s97
      %p99 = scmp.eq.s32.totalorder %s26, 0
      %p100 = por %p98, %p99
      %s102 = sadd.s32 %s101, 1
      %p105 = scmp.eq.s32.totalorder %s20, 1
      %p106 = scmp.ne.s32.totalorder %s101, %s103
      %p107 = scmp.eq.s32.totalorder %s20, 0
      %p108 = por %p106, %p107
      %p109 = scmp.ne.s32.totalorder %s101, %s103
      %p110 = scmp.eq.s32.totalorder %s25, 1
      %p111 = por %p109, %p110
      %p112 = scmp.ne.s32.totalorder %s103, %s104
      %p113 = scmp.eq.s32.totalorder %s25, 0
      %p114 = por %p112, %p113
      %p115 = scmp.ne.s32.totalorder %s103, %s104
      %p116 = scmp.eq.s32.totalorder %s26, 1
      %p117 = por %p115, %p116
      %p119 = scmp.ne.s32.totalorder %s104, %s118
      %p120 = scmp.eq.s32.totalorder %s26, 0
      %p121 = por %p119, %p120
      %s123 = sadd.s32 %s122, 1
      %p126 = scmp.eq.s32.totalorder %s20, 1
      %p127 = scmp.ne.s32.totalorder %s122, %s124
      %p128 = scmp.eq.s32.totalorder %s20, 0
      %p129 = por %p127, %p128
      %p130 = scmp.ne.s32.totalorder %s122, %s124
      %p131 = scmp.eq.s32.totalorder %s25, 1
      %p132 = por %p130, %p131
      %p133 = scmp.ne.s32.totalorder %s124, %s125
      %p134 = scmp.eq.s32.totalorder %s25, 0
      %p135 = por %p133, %p134
      %p136 = scmp.ne.s32.totalorder %s124, %s125
      %p137 = scmp.eq.s32.totalorder %s26, 1
      %p138 = por %p136, %p137
      %p140 = scmp.ne.s32.totalorder %s125, %s139
      %p141 = scmp.eq.s32.totalorder %s26, 0
      %p142 = por %p140, %p141
      %s144 = sadd.s32 %s143, 1
      %p147 = scmp.eq.s32.totalorder %s20, 1
      %p148 = scmp.ne.s32.totalorder %s143, %s145
      %p149 = scmp.eq.s32.totalorder %s20, 0
      %p150 = por %p148, %p149
      %p151 = scmp.ne.s32.totalorder %s143, %s145
      %p152 = scmp.eq.s32.totalorder %s25, 1
      %p153 = por %p151, %p152
      %p154 = scmp.ne.s32.totalorder %s145, %s146
      %p155 = scmp.eq.s32.totalorder %s25, 0
      %p156 = por %p154, %p155
      %p157 = scmp.ne.s32.totalorder %s145, %s146
      %p158 = scmp.eq.s32.totalorder %s26, 1
      %p159 = por %p157, %p158
      %p161 = scmp.ne.s32.totalorder %s146, %s160
      %p162 = scmp.eq.s32.totalorder %s26, 0
      %p163 = por %p161, %p162
      %s165 = sadd.s32 %s164, 1
      %p168 = scmp.eq.s32.totalorder %s20, 1
      %p169 = scmp.ne.s32.totalorder %s164, %s166
      %p170 = scmp.eq.s32.totalorder %s20, 0
      %p171 = por %p169, %p170
      %p172 = scmp.ne.s32.totalorder %s164, %s166
      %p173 = scmp.eq.s32.totalorder %s25, 1
      %p174 = por %p172, %p173
      %p175 = scmp.ne.s32.totalorder %s166, %s167
      %p176 = scmp.eq.s32.totalorder %s25, 0
      %p177 = por %p175, %p176
      %p178 = scmp.ne.s32.totalorder %s166, %s167
      %p179 = scmp.eq.s32.totalorder %s26, 1
      %p180 = por %p178, %p179
      %p182 = scmp.ne.s32.totalorder %s167, %s181
      %p183 = scmp.eq.s32.totalorder %s26, 0
      %p184 = por %p182, %p183
      %s186 = sadd.s32 %s185, 1
      %p189 = scmp.eq.s32.totalorder %s20, 1
      %p190 = scmp.ne.s32.totalorder %s185, %s187
      %p191 = scmp.eq.s32.totalorder %s20, 0
      %p192 = por %p190, %p191
      %p193 = scmp.ne.s32.totalorder %s185, %s187
      %p194 = scmp.eq.s32.totalorder %s25, 1
      %p195 = por %p193, %p194
      %p196 = scmp.ne.s32.totalorder %s187, %s188
      %p197 = scmp.eq.s32.totalorder %s25, 0
      %p198 = por %p196, %p197
      %p199 = scmp.ne.s32.totalorder %s187, %s188
      %p200 = scmp.eq.s32.totalorder %s26, 1
      %p201 = por %p199, %p200
      %p203 = scmp.ne.s32.totalorder %s188, %s202
      %p204 = scmp.eq.s32.totalorder %s26, 0
      %p205 = por %p203, %p204
      %s207 = sadd.s32 %s206, 1
      %p210 = scmp.eq.s32.totalorder %s20, 1
      %p211 = scmp.ne.s32.totalorder %s206, %s208
      %p212 = scmp.eq.s32.totalorder %s20, 0
      %p213 = por %p211, %p212
      %p214 = scmp.ne.s32.totalorder %s206, %s208
      %p215 = scmp.eq.s32.totalorder %s25, 1
      %p216 = por %p214, %p215
      %p217 = scmp.ne.s32.totalorder %s208, %s209
      %p218 = scmp.eq.s32.totalorder %s25, 0
      %p219 = por %p217, %p218
      %p220 = scmp.ne.s32.totalorder %s208, %s209
      %p221 = scmp.eq.s32.totalorder %s26, 1
      %p222 = por %p220, %p221
      %p224 = scmp.ne.s32.totalorder %s209, %s223
      %p225 = scmp.eq.s32.totalorder %s26, 0
      %p226 = por %p224, %p225
      %s227 = ssub.s32 %s20, %s27
      %p228 = scmp.eq.s32.totalorder %s227, 0
      %s230 = sadd.s32 %s229, 1
      %s231 = scalar_select %p228, %s229, %s230
      %p234 = pneg %p228
      %p235 = scmp.eq.s32.totalorder %s20, 1
      %p236 = por %p234, %p235
      %p237 = scmp.ne.s32.totalorder %s229, %s232
      %p238 = scmp.eq.s32.totalorder %s20, 0
      %p239 = por %p237, %p238
      %p240 = scmp.ne.s32.totalorder %s229, %s232
      %p241 = scmp.eq.s32.totalorder %s25, 1
      %p242 = por %p240, %p241
      %p243 = scmp.ne.s32.totalorder %s232, %s233
      %p244 = scmp.eq.s32.totalorder %s25, 0
      %p245 = por %p243, %p244
      %p246 = scmp.ne.s32.totalorder %s232, %s233
      %p247 = scmp.eq.s32.totalorder %s26, 1
      %p248 = por %p246, %p247
      %p250 = scmp.ne.s32.totalorder %s233, %s249
      %p251 = scmp.eq.s32.totalorder %s26, 0
      %p252 = por %p250, %p251
      %p253 = scmp.le.s32.totalorder 1, %s20
      %p254 = scmp.lt.s32.totalorder %s20, 3
      %p255 = pnand %p253, %p254
      %p256 = pneg %p255
      // Predicated region
      $region9: #{tpu_custom_call.1} parent=5 // pred_check
        _
      $region10: #{tpu_custom_call.1} parent=5 // pred_check_branch
        %258 = sbr.rel (%p255) target = $region12
      $region11: #{tpu_custom_call.1} parent=5 // pred_region
        %s259 = ssub.s32 %s20, 1
        // Predicated region
        $region13: #{tpu_custom_call.1} parent=11 // pred_check
          %p260 = pneg %p93
        $region14: #{tpu_custom_call.1} parent=11 // pred_check_branch
          %262 = sbr.rel (%p260) target = $region16
        $region15: #{tpu_custom_call.1} parent=11 // pred_region
          _
        $region16: #{tpu_custom_call.1} parent=11 // pred_fallthru
          _
        // Predicated region
        $region17: #{tpu_custom_call.1} parent=11 // pred_check
          %p263 = pneg %p114
        $region18: #{tpu_custom_call.1} parent=11 // pred_check_branch
          %265 = sbr.rel (%p263) target = $region20
        $region19: #{tpu_custom_call.1} parent=11 // pred_region
          _
        $region20: #{tpu_custom_call.1} parent=11 // pred_fallthru
          _
        // Predicated region
        $region21: #{tpu_custom_call.1} parent=11 // pred_check
          %p266 = pneg %p135
        $region22: #{tpu_custom_call.1} parent=11 // pred_check_branch
          %268 = sbr.rel (%p266) target = $region24
        $region23: #{tpu_custom_call.1} parent=11 // pred_region
          _
        $region24: #{tpu_custom_call.1} parent=11 // pred_fallthru
          _
        // Predicated region
        $region25: #{tpu_custom_call.1} parent=11 // pred_check
          %p269 = pneg %p156
        $region26: #{tpu_custom_call.1} parent=11 // pred_check_branch
          %271 = sbr.rel (%p269) target = $region28
        $region27: #{tpu_custom_call.1} parent=11 // pred_region
          _
        $region28: #{tpu_custom_call.1} parent=11 // pred_fallthru
          _
        // Predicated region
        $region29: #{tpu_custom_call.1} parent=11 // pred_check
          %p272 = pneg %p177
        $region30: #{tpu_custom_call.1} parent=11 // pred_check_branch
          %274 = sbr.rel (%p272) target = $region32
        $region31: #{tpu_custom_call.1} parent=11 // pred_region
          _
        $region32: #{tpu_custom_call.1} parent=11 // pred_fallthru
          _
        // Predicated region
        $region33: #{tpu_custom_call.1} parent=11 // pred_check
          %p275 = pneg %p198
        $region34: #{tpu_custom_call.1} parent=11 // pred_check_branch
          %277 = sbr.rel (%p275) target = $region36
        $region35: #{tpu_custom_call.1} parent=11 // pred_region
          _
        $region36: #{tpu_custom_call.1} parent=11 // pred_fallthru
          _
        // Predicated region
        $region37: #{tpu_custom_call.1} parent=11 // pred_check
          %p278 = pneg %p219
        $region38: #{tpu_custom_call.1} parent=11 // pred_check_branch
          %280 = sbr.rel (%p278) target = $region40
        $region39: #{tpu_custom_call.1} parent=11 // pred_region
          _
        $region40: #{tpu_custom_call.1} parent=11 // pred_fallthru
          _
      $region12: #{tpu_custom_call.1} parent=5 // pred_fallthru
        _
      %p281 = scmp.lt.s32.totalorder %s20, 2
      // Predicated region
      $region41: #{tpu_custom_call.1} parent=5 // pred_check
        %p282 = pneg %p281
      $region42: #{tpu_custom_call.1} parent=5 // pred_check_branch
        %284 = sbr.rel (%p282) target = $region44
      $region43: #{tpu_custom_call.1} parent=5 // pred_region
        // Predicated region
        $region45: #{tpu_custom_call.1} parent=43 // pred_check
          %p285 = pneg %p40
        $region46: #{tpu_custom_call.1} parent=43 // pred_check_branch
          %287 = sbr.rel (%p285) target = $region48
        $region47: #{tpu_custom_call.1} parent=43 // pred_region
          %p288 = scmp.lt.s32.totalorder %s20, 1
          %s289 = scalar_select %p288, %s20, 1
          %s290 = smul.addr %s289, 4
          %s291 = scalar_lea.vmem %s0, %s290
        $region48: #{tpu_custom_call.1} parent=43 // pred_fallthru
          _
        // Predicated region
        $region49: #{tpu_custom_call.1} parent=43 // pred_check
          %p292 = pneg %p66
        $region50: #{tpu_custom_call.1} parent=43 // pred_check_branch
          %294 = sbr.rel (%p292) target = $region52
        $region51: #{tpu_custom_call.1} parent=43 // pred_region
          %p295 = scmp.lt.s32.totalorder %s20, 1
          %s296 = scalar_select %p295, %s20, 1
          %s297 = smul.addr %s296, 4
          %s298 = scalar_lea.vmem %s1, %s297
        $region52: #{tpu_custom_call.1} parent=43 // pred_fallthru
          _
      $region44: #{tpu_custom_call.1} parent=5 // pred_fallthru
        _
      %p299 = scmp.le.s32.totalorder 1, %s20
      %p300 = scmp.lt.s32.totalorder %s20, 3
      %p301 = pnand %p299, %p300
      %p302 = pneg %p301
      // Predicated region
      $region53: #{tpu_custom_call.1} parent=5 // pred_check
        _
      $region54: #{tpu_custom_call.1} parent=5 // pred_check_branch
        %304 = sbr.rel (%p301) target = $region56
      $region55: #{tpu_custom_call.1} parent=5 // pred_region
        %s305 = ssub.s32 %s20, 1
        %p306 = scmp.lt.s32.totalorder %s25, 1
        %s307 = scalar_select %p306, %s25, 1
        %s308 = smul.addr %s307, 4
        %s309 = scalar_lea.vmem %s0, %s308
        %p310 = pneg %p46
        %p311 = pneg %p43
        %p312 = scmp.lt.s32.totalorder %s25, 1
        %s313 = scalar_select %p312, %s25, 1
        %s314 = smul.addr %s313, 4
        %s315 = scalar_lea.vmem %s1, %s314
        %p316 = pneg %p72
        %p317 = pneg %p69
        %p318 = pneg %p93
        %p319 = pneg %p90
        %p320 = pneg %p114
        %p321 = pneg %p111
        %p322 = pneg %p135
        %p323 = pneg %p132
        %p324 = pneg %p156
        %p325 = pneg %p153
        %p326 = pneg %p177
        %p327 = pneg %p174
        %p328 = pneg %p198
        %p329 = pneg %p195
        %p330 = pneg %p219
        %p331 = pneg %p216
        %p332 = pneg %p245
        %p333 = pneg %p242
        %s334 = sand.u32 %s232, 1
        %s335 = scalar_lea.sflag [#allocation4], %s334
        %s336 = sand.u32 %s232, 1
        %s337 = smul.addr %s336, 4
        %s338 = scalar_lea.vmem [#allocation3], %s337
        %p339 = scmp.lt.s32.totalorder %s25, 1
        %s340 = scalar_select %p339, %s25, 1
        %s341 = smul.addr %s340, 4
        %s342 = scalar_lea.vmem %s0, %s341
        %p343 = scmp.lt.s32.totalorder %s25, 1
        %s344 = scalar_select %p343, %s25, 1
        %s345 = smul.addr %s344, 4
        %s346 = scalar_lea.vmem %s1, %s345
        %v348 = vld [vmem:[%s342] sm:$0xf]
        %v349 = vld [vmem:[%s346] sm:$0xf]
        %v350 = vld [vmem:[%s2] sm:$0xff]
        %v351 = vld [vmem:[%s2 + $0x8] sm:$0xff]
        %v352 = vld [vmem:[%s2 + $0x10] sm:$0xff]
        %v353 = vld [vmem:[%s2 + $0x18] sm:$0xff]
        %v354 = vld [vmem:[%s3] sm:$0xff]
        %v355 = vld [vmem:[%s3 + $0x8] sm:$0xff]
        %v356 = vld [vmem:[%s3 + $0x10] sm:$0xff]
        %v357 = vld [vmem:[%s3 + $0x18] sm:$0xff]
        %v358 = vld [vmem:[%s4] sm:$0xff]
        %v359 = vld [vmem:[%s4 + $0x8] sm:$0xff]
        %v360 = vld [vmem:[%s4 + $0x10] sm:$0xff]
        %v361 = vld [vmem:[%s4 + $0x18] sm:$0xff]
        %363 = vset.pattern.permute.xlu0 0
        %364 = vperm.xlu0 %363, %v350
        %v365 = vpop.permute.xlu0 %364
        %368 = vset.pattern.permute.xlu0 0
        %369 = vperm.xlu0 %368, %v351
        %v370 = vpop.permute.xlu0 %369
        %373 = vset.pattern.permute.xlu0 0
        %374 = vperm.xlu0 %373, %v352
        %v375 = vpop.permute.xlu0 %374
        %378 = vset.pattern.permute.xlu0 0
        %379 = vperm.xlu0 %378, %v353
        %v380 = vpop.permute.xlu0 %379
        %v383 = vperm.slane %v348, 0
        %v384 = vperm.slane %v348, 1
        %v385 = vperm.slane %v348, 2
        %v386 = vperm.slane %v348, 3
        %v391 = vmul.f32 %v365, %v383
        %v392 = vmul.f32 %v365, %v384
        %v393 = vmul.f32 %v365, %v385
        %v394 = vmul.f32 %v365, %v386
        %v395 = vmul.f32 %v370, %v383
        %v396 = vmul.f32 %v370, %v384
        %v397 = vmul.f32 %v370, %v385
        %v398 = vmul.f32 %v370, %v386
        %v399 = vmul.f32 %v375, %v383
        %v400 = vmul.f32 %v375, %v384
        %v401 = vmul.f32 %v375, %v385
        %v402 = vmul.f32 %v375, %v386
        %v403 = vmul.f32 %v380, %v383
        %v404 = vmul.f32 %v380, %v384
        %v405 = vmul.f32 %v380, %v385
        %v406 = vmul.f32 %v380, %v386
        %408 = vset.pattern.permute.xlu0 0
        %409 = vperm.xlu0 %408, %v354
        %v410 = vpop.permute.xlu0 %409
        %413 = vset.pattern.permute.xlu0 0
        %414 = vperm.xlu0 %413, %v355
        %v415 = vpop.permute.xlu0 %414
        %418 = vset.pattern.permute.xlu0 0
        %419 = vperm.xlu0 %418, %v356
        %v420 = vpop.permute.xlu0 %419
        %423 = vset.pattern.permute.xlu0 0
        %424 = vperm.xlu0 %423, %v357
        %v425 = vpop.permute.xlu0 %424
        %v428 = vperm.slane %v349, 0
        %v429 = vperm.slane %v349, 1
        %v430 = vperm.slane %v349, 2
        %v431 = vperm.slane %v349, 3
        %v436 = vmul.f32 %v410, %v428
        %v437 = vmul.f32 %v410, %v429
        %v438 = vmul.f32 %v410, %v430
        %v439 = vmul.f32 %v410, %v431
        %v440 = vmul.f32 %v415, %v428
        %v441 = vmul.f32 %v415, %v429
        %v442 = vmul.f32 %v415, %v430
        %v443 = vmul.f32 %v415, %v431
        %v444 = vmul.f32 %v420, %v428
        %v445 = vmul.f32 %v420, %v429
        %v446 = vmul.f32 %v420, %v430
        %v447 = vmul.f32 %v420, %v431
        %v448 = vmul.f32 %v425, %v428
        %v449 = vmul.f32 %v425, %v429
        %v450 = vmul.f32 %v425, %v430
        %v451 = vmul.f32 %v425, %v431
        %v452 = vadd.f32 %v391, %v436
        %v453 = vadd.f32 %v392, %v437
        %v454 = vadd.f32 %v393, %v438
        %v455 = vadd.f32 %v394, %v439
        %v456 = vadd.f32 %v395, %v440
        %v457 = vadd.f32 %v396, %v441
        %v458 = vadd.f32 %v397, %v442
        %v459 = vadd.f32 %v398, %v443
        %v460 = vadd.f32 %v399, %v444
        %v461 = vadd.f32 %v400, %v445
        %v462 = vadd.f32 %v401, %v446
        %v463 = vadd.f32 %v402, %v447
        %v464 = vadd.f32 %v403, %v448
        %v465 = vadd.f32 %v404, %v449
        %v466 = vadd.f32 %v405, %v450
        %v467 = vadd.f32 %v406, %v451
        %469 = vset.pattern.permute.xlu0 0
        %470 = vperm.xlu0 %469, %v358
        %v471 = vpop.permute.xlu0 %470
        %474 = vset.pattern.permute.xlu0 0
        %475 = vperm.xlu0 %474, %v359
        %v476 = vpop.permute.xlu0 %475
        %479 = vset.pattern.permute.xlu0 0
        %480 = vperm.xlu0 %479, %v360
        %v481 = vpop.permute.xlu0 %480
        %484 = vset.pattern.permute.xlu0 0
        %485 = vperm.xlu0 %484, %v361
        %v486 = vpop.permute.xlu0 %485
        %v488 = vadd.f32 %v452, %v471
        %v489 = vadd.f32 %v453, %v471
        %v490 = vadd.f32 %v454, %v471
        %v491 = vadd.f32 %v455, %v471
        %v492 = vadd.f32 %v456, %v476
        %v493 = vadd.f32 %v457, %v476
        %v494 = vadd.f32 %v458, %v476
        %v495 = vadd.f32 %v459, %v476
        %v496 = vadd.f32 %v460, %v481
        %v497 = vadd.f32 %v461, %v481
        %v498 = vadd.f32 %v462, %v481
        %v499 = vadd.f32 %v463, %v481
        %v500 = vadd.f32 %v464, %v486
        %v501 = vadd.f32 %v465, %v486
        %v502 = vadd.f32 %v466, %v486
        %v503 = vadd.f32 %v467, %v486
        %v504 = vmax.f32 %v488, 0.0
        %v505 = vmax.f32 %v489, 0.0
        %v506 = vmax.f32 %v490, 0.0
        %v507 = vmax.f32 %v491, 0.0
        %v508 = vmax.f32 %v492, 0.0
        %v509 = vmax.f32 %v493, 0.0
        %v510 = vmax.f32 %v494, 0.0
        %v511 = vmax.f32 %v495, 0.0
        %v512 = vmax.f32 %v496, 0.0
        %v513 = vmax.f32 %v497, 0.0
        %v514 = vmax.f32 %v498, 0.0
        %v515 = vmax.f32 %v499, 0.0
        %v516 = vmax.f32 %v500, 0.0
        %v517 = vmax.f32 %v501, 0.0
        %v518 = vmax.f32 %v502, 0.0
        %v519 = vmax.f32 %v503, 0.0
        %v520 = vld [vmem:[%s5] sm:$0xf]
        %v521 = vld [vmem:[%s5 + $0x4] sm:$0xf]
        %v522 = vld [vmem:[%s5 + $0x8] sm:$0xf]
        %v523 = vld [vmem:[%s5 + $0xc] sm:$0xf]
        %v524 = vld [vmem:[%s6] sm:$0xff]
        %v525 = vld [vmem:[%s6 + $0x8] sm:$0xff]
        %v526 = vld [vmem:[%s6 + $0x10] sm:$0xff]
        %v527 = vld [vmem:[%s6 + $0x18] sm:$0xff]
        %v528 = vpack.c.bf16 %v508, %v504
        %v529 = vpack.c.bf16 %v509, %v505
        %v530 = vpack.c.bf16 %v510, %v506
        %v531 = vpack.c.bf16 %v511, %v507
        %v532 = vpack.c.bf16 %v516, %v512
        %v533 = vpack.c.bf16 %v517, %v513
        %v534 = vpack.c.bf16 %v518, %v514
        %v535 = vpack.c.bf16 %v519, %v515
        %537 = vset.pattern.permute.xlu0 0
        %538 = vperm.xlu0 %537, %v524
        %v539 = vpop.permute.xlu0 %538
        %542 = vset.pattern.permute.xlu0 0
        %543 = vperm.xlu0 %542, %v525
        %v544 = vpop.permute.xlu0 %543
        %547 = vset.pattern.permute.xlu0 0
        %548 = vperm.xlu0 %547, %v526
        %v549 = vpop.permute.xlu0 %548
        %552 = vset.pattern.permute.xlu0 0
        %553 = vperm.xlu0 %552, %v527
        %v554 = vpop.permute.xlu0 %553
        %v560 = vunpack.c.l.b16 %v520
        %v561 = vunpack.c.l.b16 %v521
        %v562 = vunpack.c.l.b16 %v522
        %v563 = vunpack.c.l.b16 %v523
        %v564 = vpack.c.b16 %v561, %v560
        %v565 = vpack.c.b16 %v563, %v562
        %vm566 = vcmask 261120
        %v568 = vsel %vm566, %v564, 0
        %v571 = vsel %vm566, %v565, 0
        %573 = vmatpush.bf16.msra.mxu0 0
        %574 = vmatpush.bf16.msra.mxu0 0
        %575 = vmatpush.bf16.msra.mxu0 0
        %576 = vmatpush.bf16.msra.mxu0 0
        %577 = vmatpush.bf16.msra.mxu0 0
        %578 = vmatpush.bf16.msra.mxu0 0
        %579 = vmatpush.bf16.msra.mxu0 %v532
        %580 = vmatpush.bf16.msra.mxu0 %v528
        %581 = vmatmul.bf16.gmra.mxu0 %v568
        %v582 = vpop.f32.mrf.mxu0
        %v583 = vadd.f32 %v539, %v582
        %v584 = vpop.f32.mrf.mxu0
        %v585 = vadd.f32 %v544, %v584
        %586 = vmatmul.bf16.gmra.mxu0 %v571
        %v587 = vpop.f32.mrf.mxu0
        %v588 = vadd.f32 %v549, %v587
        %v589 = vpop.f32.mrf.mxu0
        %v590 = vadd.f32 %v554, %v589
        %591 = vdwg.mxu0
        %592 = vmatpush.bf16.msra.mxu0 0
        %593 = vmatpush.bf16.msra.mxu0 0
        %594 = vmatpush.bf16.msra.mxu0 0
        %595 = vmatpush.bf16.msra.mxu0 0
        %596 = vmatpush.bf16.msra.mxu0 0
        %597 = vmatpush.bf16.msra.mxu0 0
        %598 = vmatpush.bf16.msra.mxu0 %v533
        %599 = vmatpush.bf16.msra.mxu0 %v529
        %600 = vmatmul.bf16.gmra.mxu0 %v568
        %v601 = vpop.f32.mrf.mxu0
        %v602 = vadd.f32 %v539, %v601
        %v603 = vpop.f32.mrf.mxu0
        %v604 = vadd.f32 %v544, %v603
        %605 = vmatmul.bf16.gmra.mxu0 %v571
        %v606 = vpop.f32.mrf.mxu0
        %v607 = vadd.f32 %v549, %v606
        %v608 = vpop.f32.mrf.mxu0
        %v609 = vadd.f32 %v554, %v608
        %610 = vdwg.mxu0
        %611 = vmatpush.bf16.msra.mxu0 0
        %612 = vmatpush.bf16.msra.mxu0 0
        %613 = vmatpush.bf16.msra.mxu0 0
        %614 = vmatpush.bf16.msra.mxu0 0
        %615 = vmatpush.bf16.msra.mxu0 0
        %616 = vmatpush.bf16.msra.mxu0 0
        %617 = vmatpush.bf16.msra.mxu0 %v534
        %618 = vmatpush.bf16.msra.mxu0 %v530
        %619 = vmatmul.bf16.gmra.mxu0 %v568
        %v620 = vpop.f32.mrf.mxu0
        %v621 = vadd.f32 %v539, %v620
        %v622 = vpop.f32.mrf.mxu0
        %v623 = vadd.f32 %v544, %v622
        %624 = vmatmul.bf16.gmra.mxu0 %v571
        %v625 = vpop.f32.mrf.mxu0
        %v626 = vadd.f32 %v549, %v625
        %v627 = vpop.f32.mrf.mxu0
        %v628 = vadd.f32 %v554, %v627
        %629 = vdwg.mxu0
        %630 = vmatpush.bf16.msra.mxu0 0
        %631 = vmatpush.bf16.msra.mxu0 0
        %632 = vmatpush.bf16.msra.mxu0 0
        %633 = vmatpush.bf16.msra.mxu0 0
        %634 = vmatpush.bf16.msra.mxu0 0
        %635 = vmatpush.bf16.msra.mxu0 0
        %636 = vmatpush.bf16.msra.mxu0 %v535
        %637 = vmatpush.bf16.msra.mxu0 %v531
        %638 = vmatmul.bf16.gmra.mxu0 %v568
        %v639 = vpop.f32.mrf.mxu0
        %v640 = vadd.f32 %v539, %v639
        %v641 = vpop.f32.mrf.mxu0
        %v642 = vadd.f32 %v544, %v641
        %643 = vmatmul.bf16.gmra.mxu0 %v571
        %v644 = vpop.f32.mrf.mxu0
        %v645 = vadd.f32 %v549, %v644
        %v646 = vpop.f32.mrf.mxu0
        %v647 = vadd.f32 %v554, %v646
        %648 = vdwg.mxu0
        %v649 = vmax.f32 %v583, 0.0
        %v650 = vmax.f32 %v602, 0.0
        %v651 = vmax.f32 %v621, 0.0
        %v652 = vmax.f32 %v640, 0.0
        %v653 = vmax.f32 %v585, 0.0
        %v654 = vmax.f32 %v604, 0.0
        %v655 = vmax.f32 %v623, 0.0
        %v656 = vmax.f32 %v642, 0.0
        %v657 = vmax.f32 %v588, 0.0
        %v658 = vmax.f32 %v607, 0.0
        %v659 = vmax.f32 %v626, 0.0
        %v660 = vmax.f32 %v645, 0.0
        %v661 = vmax.f32 %v590, 0.0
        %v662 = vmax.f32 %v609, 0.0
        %v663 = vmax.f32 %v628, 0.0
        %v664 = vmax.f32 %v647, 0.0
        %v665 = vld [vmem:[%s7] sm:$0xff]
        %v666 = vld [vmem:[%s7 + $0x8] sm:$0xff]
        %v667 = vld [vmem:[%s7 + $0x10] sm:$0xff]
        %v668 = vld [vmem:[%s7 + $0x18] sm:$0xff]
        %v669 = vld [vmem:[#allocation2] sm:$0x1]
        %671 = vset.pattern.permute.xlu0 0
        %672 = vperm.xlu0 %671, %v665
        %v673 = vpop.permute.xlu0 %672
        %676 = vset.pattern.permute.xlu0 0
        %677 = vperm.xlu0 %676, %v666
        %v678 = vpop.permute.xlu0 %677
        %681 = vset.pattern.permute.xlu0 0
        %682 = vperm.xlu0 %681, %v667
        %v683 = vpop.permute.xlu0 %682
        %686 = vset.pattern.permute.xlu0 0
        %687 = vperm.xlu0 %686, %v668
        %v688 = vpop.permute.xlu0 %687
        %v690 = vmul.f32 %v673, %v649
        %v691 = vmul.f32 %v673, %v650
        %v692 = vmul.f32 %v673, %v651
        %v693 = vmul.f32 %v673, %v652
        %v694 = vmul.f32 %v678, %v653
        %v695 = vmul.f32 %v678, %v654
        %v696 = vmul.f32 %v678, %v655
        %v697 = vmul.f32 %v678, %v656
        %v698 = vmul.f32 %v683, %v657
        %v699 = vmul.f32 %v683, %v658
        %v700 = vmul.f32 %v683, %v659
        %v701 = vmul.f32 %v683, %v660
        %v702 = vmul.f32 %v688, %v661
        %v703 = vmul.f32 %v688, %v662
        %v704 = vmul.f32 %v688, %v663
        %v705 = vmul.f32 %v688, %v664
        %v706 = vadd.f32 %v690, %v694
        %v707 = vadd.f32 %v706, %v698
        %v708 = vadd.f32 %v707, %v702
        %v709 = vrot.slane %v708, 4
        %v710 = vadd.f32 %v708, %v709
        %v711 = vrot.slane %v710, 2
        %v712 = vadd.f32 %v710, %v711
        %v713 = vrot.slane %v712, 1
        %v714 = vadd.f32 %v712, %v713
        %v715 = vadd.f32 %v691, %v695
        %v716 = vadd.f32 %v715, %v699
        %v717 = vadd.f32 %v716, %v703
        %v718 = vrot.slane %v717, 4
        %v719 = vadd.f32 %v717, %v718
        %v720 = vrot.slane %v719, 2
        %v721 = vadd.f32 %v719, %v720
        %v722 = vrot.slane %v721, 1
        %v723 = vadd.f32 %v721, %v722
        %v724 = vadd.f32 %v692, %v696
        %v725 = vadd.f32 %v724, %v700
        %v726 = vadd.f32 %v725, %v704
        %v727 = vrot.slane %v726, 4
        %v728 = vadd.f32 %v726, %v727
        %v729 = vrot.slane %v728, 2
        %v730 = vadd.f32 %v728, %v729
        %v731 = vrot.slane %v730, 1
        %v732 = vadd.f32 %v730, %v731
        %v733 = vadd.f32 %v693, %v697
        %v734 = vadd.f32 %v733, %v701
        %v735 = vadd.f32 %v734, %v705
        %v736 = vrot.slane %v735, 4
        %v737 = vadd.f32 %v735, %v736
        %v738 = vrot.slane %v737, 2
        %v739 = vadd.f32 %v737, %v738
        %v740 = vrot.slane %v739, 1
        %v741 = vadd.f32 %v739, %v740
        %743 = vset.pattern.permute.xlu0 0
        %744 = vperm.xlu0 %743, %v669
        %v745 = vpop.permute.xlu0 %744
        %v747 = vperm.slane %v745, 0
        %v748 = vadd.f32 %v714, %v747
        %v749 = vadd.f32 %v723, %v747
        %v750 = vadd.f32 %v732, %v747
        %v751 = vadd.f32 %v741, %v747
        %v756 = vrot.slane %v749, 7
        %v757 = vrot.slane %v750, 6
        %v758 = vrot.slane %v751, 5
        %vm759 = vcmask 1040384
        %v760 = vsel %vm759, %v748, %v756
        %vm761 = vcmask 1042434
        %v762 = vsel %vm761, %v757, %v758
        %vm763 = vcmask 1041408
        %v764 = vsel %vm763, %v760, %v762
        %v766 = vlaneseq
        %vm767 = vcmp.ge.s32.totalorder %v766, 0
        %vm768 = vcmp.lt.s32.totalorder %v766, 512
        %vm769 = vmand %vm767, %vm768
        %770 = vst.msk [vmem:[%s338] sm:$0xf] %vm769, %v764
        %s771 = sand.u32 %s232, 1
        %s772 = scalar_lea.sflag [#allocation4], %s771
        %s773 = sand.u32 %s232, 1
        %s774 = smul.addr %s773, 4
        %s775 = scalar_lea.vmem [#allocation3], %s774
        // Predicated region
        $region57: #{tpu_custom_call.1} parent=55 // pred_check
          %p776 = pneg %p242
        $region58: #{tpu_custom_call.1} parent=55 // pred_check_branch
          %778 = sbr.rel (%p776) target = $region60
        $region59: #{tpu_custom_call.1} parent=55 // pred_region
          %780 = vsyncadd %s772, 0
          %s781 = smul.addr %s25, 4
          %s782 = scalar_lea.hbm %s9, %s781
          %s784 = sshll.u32 %s775, 4
          %s785 = int_to_ptr.vmem [resolvable:$true] %s784
          %s786 = sshll.u32 %s782, 4
          %s787 = int_to_ptr.hbm [resolvable:$true] %s786
          %789 = dma.vmem_to_hbm [thread:$0]  %s785, 64, %s787, %s772
        $region60: #{tpu_custom_call.1} parent=55 // pred_fallthru
          _
      $region56: #{tpu_custom_call.1} parent=5 // pred_fallthru
        _
      %p790 = scmp.le.s32.totalorder 2, %s20
      // Predicated region
      $region61: #{tpu_custom_call.1} parent=5 // pred_check
        %p791 = pneg %p790
      $region62: #{tpu_custom_call.1} parent=5 // pred_check_branch
        %793 = sbr.rel (%p791) target = $region64
      $region63: #{tpu_custom_call.1} parent=5 // pred_region
        %s794 = ssub.s32 %s20, 2
        // Predicated region
        $region65: #{tpu_custom_call.1} parent=63 // pred_check
          %p795 = pneg %p248
        $region66: #{tpu_custom_call.1} parent=63 // pred_check_branch
          %797 = sbr.rel (%p795) target = $region68
        $region67: #{tpu_custom_call.1} parent=63 // pred_region
          %s798 = sand.u32 %s233, 1
          %s799 = scalar_lea.sflag [#allocation4], %s798
          %s800 = sand.u32 %s233, 1
          %s801 = smul.addr %s800, 4
          %s802 = scalar_lea.vmem [#allocation3], %s801
          %804 = dma.done %s799, 64
        $region68: #{tpu_custom_call.1} parent=63 // pred_fallthru
          _
      $region64: #{tpu_custom_call.1} parent=5 // pred_fallthru
        _
    $region6: #{tpu_custom_call.1} parent=1 // loop_footer
      %s24 = sadd.s32 1, %s20
    $region7: #{tpu_custom_call.1} parent=1 // loop_footer_branch
      %19 = sbr.rel target = $region3
    $region8: #{tpu_custom_call.1} parent=1 // loop_exit
      _
    %805 = vsyncpa [#allocation4], 1
    %s806 = scalar_lea.sflag [#allocation4], 1
    %807 = vsyncpa %s806, 1

</llo_original>
